<compile_context>
chip_gen: v6e
topology: v6e:2x2x1
jax: 0.10.0
libtpu: 0.0.40
codegen_flags: <defaults>
</compile_context>

<pallas_src>
import functools

import jax
import jax.numpy as jnp
from jax import lax
from jax.experimental import pallas as pl
from jax.experimental.pallas import tpu as pltpu

_LANES = 128


def _entity_embed_kernel(x_ref, w_ref, b_ref, o_ref):
    # x_ref: (TM, K)  [mxu dtype]
    # w_ref: (Np, K)  [mxu dtype]  (native nn.Linear layout: (out_features, in_features))
    # b_ref: (1, Np)  [f32]
    # o_ref: (TM, Np)
    acc = lax.dot_general(
        x_ref[...],
        w_ref[...],
        dimension_numbers=(((1,), (1,)), ((), ())),   # x @ W^T, no transpose copy needed
        preferred_element_type=jnp.float32,
    )
    acc = acc + b_ref[...]                            # f32 bias broadcast over rows
    o_ref[...] = jnp.maximum(acc, 0.0).astype(o_ref.dtype)


@functools.partial(jax.jit, static_argnames=("tile_m", "mxu_dtype"))
def entity_embedder(x, weight, bias, *, tile_m=1024, mxu_dtype=jnp.bfloat16):
    """Pallas equivalent of F.relu(nn.Linear(raw_feature_dim, embed_dim)(x)).

    x:      (..., raw_feature_dim)
    weight: (embed_dim, raw_feature_dim)   (PyTorch nn.Linear convention)
    bias:   (embed_dim,)
    returns (..., embed_dim) in x.dtype
    """
    orig_shape = x.shape
    K = orig_shape[-1]
    N = weight.shape[0]
    out_dtype = x.dtype

    x2d = x.reshape(-1, K)
    M = x2d.shape[0]

    # Lane-dense output: pad embed dim up to a multiple of 128 (zero pad -> relu(0+0)=0,
    # sliced off below, so semantics are unchanged).
    Np = ((N + _LANES - 1) // _LANES) * _LANES
    if Np != N:
        weight = jnp.pad(weight, ((0, Np - N), (0, 0)))
        bias = jnp.pad(bias, (0, Np - N))
    b2d = bias.astype(jnp.float32).reshape(1, Np)

    # bf16 MXU inputs, f32 accumulate/epilogue.
    xk = x2d.astype(mxu_dtype)
    wk = weight.astype(mxu_dtype)

    # Row tile: multiple of 8 (sublane) or the full dim when M is small.
    TM = tile_m if M >= tile_m else M
    grid_m = pl.cdiv(M, TM)

    cost = pl.CostEstimate(
        flops=2 * M * Np * K,
        transcendentals=0,
        bytes_accessed=int(
            M * K * jnp.dtype(mxu_dtype).itemsize
            + Np * K * jnp.dtype(mxu_dtype).itemsize
            + Np * 4
            + M * Np * jnp.dtype(out_dtype).itemsize
        ),
    )

    out = pl.pallas_call(
        _entity_embed_kernel,
        out_shape=jax.ShapeDtypeStruct((M, Np), out_dtype),
        grid_spec=pltpu.PrefetchScalarGridSpec(
            num_scalar_prefetch=0,
            grid=(grid_m,),
            in_specs=[
                pl.BlockSpec((TM, K), lambda i: (i, 0)),   # x: streamed per row-tile
                pl.BlockSpec((Np, K), lambda i: (0, 0)),   # W: resident across tiles
                pl.BlockSpec((1, Np), lambda i: (0, 0)),   # b: resident across tiles
            ],
            out_specs=pl.BlockSpec((TM, Np), lambda i: (i, 0)),
        ),
        compiler_params=pltpu.CompilerParams(
            dimension_semantics=("parallel",),             # independent row-tiles (v7x: 2 TCs)
        ),
        cost_estimate=cost,
    )(xk, wk, b2d)

    out = out[:, :N]
    return out.reshape(*orig_shape[:-1], N)


if __name__ == "__main__":
    raw_feature_dim = 16
    embed_dim = 32

    key = jax.random.PRNGKey(0)
    kx, kw, kb, kx2 = jax.random.split(key, 4)

    # nn.Linear-shaped parameters: W (out, in), b (out,)
    weight = jax.random.normal(kw, (embed_dim, raw_feature_dim), jnp.float32) * 0.1
    bias = jax.random.normal(kb, (embed_dim,), jnp.float32) * 0.1

    # Small case (single row-tile path).
    batch, n_entities = 2, 8
    x = jax.random.normal(kx, (batch, n_entities, raw_feature_dim), jnp.float32)
    out = jax.block_until_ready(entity_embedder(x, weight, bias))
    ref = jnp.maximum(x @ weight.T + bias, 0.0)
    assert out.shape == (batch, n_entities, embed_dim)
    # bf16 MXU inputs -> compare against f32 reference with bf16-appropriate tolerance.
    assert jnp.allclose(out, ref, atol=2e-2, rtol=2e-2)

    # Larger case exercising the tiled / partial-last-block path (M = 1200, TM = 256).
    batch2, n_entities2 = 4, 300
    x2 = jax.random.normal(kx2, (batch2, n_entities2, raw_feature_dim), jnp.float32)
    out2 = jax.block_until_ready(entity_embedder(x2, weight, bias, tile_m=256))
    ref2 = jnp.maximum(x2 @ weight.T + bias, 0.0)
    assert out2.shape == (batch2, n_entities2, embed_dim)
    assert jnp.allclose(out2, ref2, atol=2e-2, rtol=2e-2)

    print("KERNEL_OK")
</pallas_src>

<mosaic_0001>
module attributes {stable_mosaic.version = 11 : i64} {
  func.func @_entity_embed_kernel(%arg0: i32, %arg1: memref<16x16xbf16, #tpu.memory_space<vmem>>, %arg2: memref<128x16xbf16, #tpu.memory_space<vmem>>, %arg3: memref<1x128xf32, #tpu.memory_space<vmem>>, %arg4: memref<16x128xf32, #tpu.memory_space<vmem>>) attributes {dimension_semantics = [#tpu.dimension_semantics<parallel>], iteration_bounds = array<i64: 1>, scalar_prefetch = 0 : i64, scratch_operands = 0 : i64, tpu.core_type = #tpu.core_type<tc>, window_params = [{transform_indices = @transform_0, window_bounds = array<i64: 16, 16>}, {pipeline_mode = #tpu.pipeline_mode<synchronous>, transform_indices = @transform_1, window_bounds = array<i64: 128, 16>}, {pipeline_mode = #tpu.pipeline_mode<synchronous>, transform_indices = @transform_2, window_bounds = array<i64: 1, 128>}, {transform_indices = @transform_3, window_bounds = array<i64: 16, 128>}]} {
    %c0 = arith.constant 0 : index
    %c0_0 = arith.constant 0 : index
    %0 = vector.load %arg1[%c0, %c0_0] : memref<16x16xbf16, #tpu.memory_space<vmem>>, vector<16x16xbf16>
    %c0_1 = arith.constant 0 : index
    %c0_2 = arith.constant 0 : index
    %1 = vector.load %arg2[%c0_1, %c0_2] : memref<128x16xbf16, #tpu.memory_space<vmem>>, vector<128x16xbf16>
    %cst = arith.constant dense<0.000000e+00> : vector<16x128xf32>
    %2 = tpu.matmul %0, %1, %cst {dimension_numbers = #tpu.dot_dimension_numbers<[1], [1], [0], [0], [0, 0, 1, 0], [], []>} : vector<16x16xbf16>, vector<128x16xbf16>, vector<16x128xf32> -> vector<16x128xf32>
    %c0_3 = arith.constant 0 : index
    %c0_4 = arith.constant 0 : index
    %3 = vector.load %arg3[%c0_3, %c0_4] : memref<1x128xf32, #tpu.memory_space<vmem>>, vector<1x128xf32>
    %4 = vector.broadcast %3 : vector<1x128xf32> to vector<16x128xf32>
    %5 = arith.addf %2, %4 : vector<16x128xf32>
    %cst_5 = arith.constant 0.000000e+00 : f32
    %6 = vector.broadcast %cst_5 : f32 to vector<16x128xf32>
    %7 = arith.maximumf %5, %6 : vector<16x128xf32>
    %c0_6 = arith.constant 0 : index
    %c0_7 = arith.constant 0 : index
    %8 = vector.load %arg4[%c0_6, %c0_7] : memref<16x128xf32, #tpu.memory_space<vmem>>, vector<16x128xf32>
    tpu.vector_store %arg4[%c0_6, %c0_7], %7 {strides = array<i32>} : memref<16x128xf32, #tpu.memory_space<vmem>>, vector<16x128xf32>,
    return
  }
  func.func @transform_0(%arg0: i32) -> (i32, i32) {
    %c0_i32 = arith.constant 0 : i32
    %c0_i32_0 = arith.constant 0 : i32
    return %arg0, %c0_i32 : i32, i32
  }
  func.func @transform_1(%arg0: i32) -> (i32, i32) {
    %c0_i32 = arith.constant 0 : i32
    %c0_i32_0 = arith.constant 0 : i32
    %c0_i32_1 = arith.constant 0 : i32
    return %c0_i32, %c0_i32_0 : i32, i32
  }
  func.func @transform_2(%arg0: i32) -> (i32, i32) {
    %c0_i32 = arith.constant 0 : i32
    %c0_i32_0 = arith.constant 0 : i32
    %c0_i32_1 = arith.constant 0 : i32
    return %c0_i32, %c0_i32_0 : i32, i32
  }
  func.func @transform_3(%arg0: i32) -> (i32, i32) {
    %c0_i32 = arith.constant 0 : i32
    %c0_i32_0 = arith.constant 0 : i32
    return %arg0, %c0_i32 : i32, i32
  }
}

</mosaic_0001>

<llo_original>
// kernel: entity_embedder.1
$region0: #{entity_embedder.1}
  #allocation0 [shape = 'u32[]', space=smem, size = 0x4, offset = 0x4, fixed_abs, tag = 'smem constant byte address 0x4 - core index']
  #allocation1 [shape = 'u32[144,128]{1,0:T(1,128)}', space=vmem, size = 0x12000, scoped, tag = 'internal scratch']
  %s0 = inlined_call_operand.vmem [shape: bf16[16,16], index: 0, kind: input, shape index: {}]
  %s1 = inlined_call_operand.vmem [shape: bf16[128,16], index: 1, kind: input, shape index: {}]
  %s2 = inlined_call_operand.vmem [shape: f32[1,128], index: 2, kind: input, shape index: {}]
  %s3 = inlined_call_operand.vmem [shape: f32[16,128], index: 3, kind: output, shape index: {}]
  %s4 = sld [smem:[#allocation0]]
  $region22: #{entity_embedder.1} parent=0
    _
  %s6 = ssub.s32 1, %s4
  %s7 = scalar_select 0, %s6, %s4
  // Predicated region
  $region2: #{entity_embedder.1} parent=0 // pred_check
    _
  $region3: #{entity_embedder.1} parent=0 // pred_check_branch
    %9 = sbr.rel (0) target = $region5
  $region4: #{entity_embedder.1} parent=0 // pred_region
    _
  $region5: #{entity_embedder.1} parent=0 // pred_fallthru
    _
  // Predicated region
  $region6: #{entity_embedder.1} parent=0 // pred_check
    _
  $region7: #{entity_embedder.1} parent=0 // pred_check_branch
    %11 = sbr.rel (0) target = $region9
  $region8: #{entity_embedder.1} parent=0 // pred_region
    _
  $region9: #{entity_embedder.1} parent=0 // pred_fallthru
    _
  // Predicated region
  $region10: #{entity_embedder.1} parent=0 // pred_check
    _
  $region11: #{entity_embedder.1} parent=0 // pred_check_branch
    %13 = sbr.rel (0) target = $region13
  $region12: #{entity_embedder.1} parent=0 // pred_region
    _
  $region13: #{entity_embedder.1} parent=0 // pred_fallthru
    _
  %v15 = vld [vmem:[%s0] sm:$0xf]
  %v16 = vld [vmem:[%s0 + $0x4] sm:$0xf]
  %v17 = vld [vmem:[%s1] sm:$0xf]
  %v18 = vld [vmem:[%s1 + $0x4] sm:$0xf]
  %v19 = vld [vmem:[%s1 + $0x8] sm:$0xf]
  %v20 = vld [vmem:[%s1 + $0xc] sm:$0xf]
  %v21 = vld [vmem:[%s1 + $0x10] sm:$0xf]
  %v22 = vld [vmem:[%s1 + $0x14] sm:$0xf]
  %v23 = vld [vmem:[%s1 + $0x18] sm:$0xf]
  %v24 = vld [vmem:[%s1 + $0x1c] sm:$0xf]
  %v25 = vld [vmem:[%s1 + $0x20] sm:$0xf]
  %v26 = vld [vmem:[%s1 + $0x24] sm:$0xf]
  %v27 = vld [vmem:[%s1 + $0x28] sm:$0xf]
  %v28 = vld [vmem:[%s1 + $0x2c] sm:$0xf]
  %v29 = vld [vmem:[%s1 + $0x30] sm:$0xf]
  %v30 = vld [vmem:[%s1 + $0x34] sm:$0xf]
  %v31 = vld [vmem:[%s1 + $0x38] sm:$0xf]
  %v32 = vld [vmem:[%s1 + $0x3c] sm:$0xf]
  %v33 = vld [vmem:[%s2] sm:$0x1]
  %v35 = vlaneseq
  %v36 = vshrl.u32 %v35, 7
  %v37 = vsub.s32 0, %v36
  %v38 = vrot.slane %v33, %v37
  %v42 = vunpack.c.l.b16 %v15
  %v43 = vunpack.c.l.b16 %v16
  %v44 = vpack.c.b16 %v43, %v42
  %v61 = vunpack.c.l.b16 %v17
  %v62 = vunpack.c.l.b16 %v18
  %v63 = vunpack.c.l.b16 %v19
  %v64 = vunpack.c.l.b16 %v20
  %v65 = vunpack.c.l.b16 %v21
  %v66 = vunpack.c.l.b16 %v22
  %v67 = vunpack.c.l.b16 %v23
  %v68 = vunpack.c.l.b16 %v24
  %v69 = vunpack.c.l.b16 %v25
  %v70 = vunpack.c.l.b16 %v26
  %v71 = vunpack.c.l.b16 %v27
  %v72 = vunpack.c.l.b16 %v28
  %v73 = vunpack.c.l.b16 %v29
  %v74 = vunpack.c.l.b16 %v30
  %v75 = vunpack.c.l.b16 %v31
  %v76 = vunpack.c.l.b16 %v32
  %v77 = vpack.c.b16 %v62, %v61
  %v78 = vpack.c.b16 %v64, %v63
  %v79 = vpack.c.b16 %v66, %v65
  %v80 = vpack.c.b16 %v68, %v67
  %v81 = vpack.c.b16 %v70, %v69
  %v82 = vpack.c.b16 %v72, %v71
  %v83 = vpack.c.b16 %v74, %v73
  %v84 = vpack.c.b16 %v76, %v75
  %vm85 = vcmask 130048
  %v87 = vsel %vm85, %v44, 0
  %v90 = vsel %vm85, %v77, 0
  %v93 = vsel %vm85, %v78, 0
  %v96 = vsel %vm85, %v79, 0
  %v99 = vsel %vm85, %v80, 0
  %v102 = vsel %vm85, %v81, 0
  %v105 = vsel %vm85, %v82, 0
  %v108 = vsel %vm85, %v83, 0
  %v111 = vsel %vm85, %v84, 0
  %113 = vmatprep.subr.bf16.mxu0 0
  %114 = vmatpush1.bf16.xpose.msra.mxu0 %v111
  %115 = vmatprep.subr.bf16.mxu0 0
  %116 = vmatpush1.bf16.xpose.msra.mxu0 %v108
  %117 = vmatprep.subr.bf16.mxu0 0
  %118 = vmatpush1.bf16.xpose.msra.mxu0 %v105
  %119 = vmatprep.subr.bf16.mxu0 0
  %120 = vmatpush1.bf16.xpose.msra.mxu0 %v102
  %121 = vmatprep.subr.bf16.mxu0 0
  %122 = vmatpush1.bf16.xpose.msra.mxu0 %v99
  %123 = vmatprep.subr.bf16.mxu0 0
  %124 = vmatpush1.bf16.xpose.msra.mxu0 %v96
  %125 = vmatprep.subr.bf16.mxu0 0
  %126 = vmatpush1.bf16.xpose.msra.mxu0 %v93
  %127 = vmatprep.subr.bf16.mxu0 0
  %128 = vmatpush1.bf16.xpose.msra.mxu0 %v90
  %129 = vmatprep.subr.bf16.mxu0 0
  %130 = vmatpush2.bf16.xpose.msra.mxu0 0
  %131 = vmatprep.subr.bf16.mxu0 0
  %132 = vmatpush2.bf16.xpose.msra.mxu0 0
  %133 = vmatprep.subr.bf16.mxu0 0
  %134 = vmatpush2.bf16.xpose.msra.mxu0 0
  %135 = vmatprep.subr.bf16.mxu0 0
  %136 = vmatpush2.bf16.xpose.msra.mxu0 0
  %137 = vmatprep.subr.bf16.mxu0 0
  %138 = vmatpush2.bf16.xpose.msra.mxu0 0
  %139 = vmatprep.subr.bf16.mxu0 0
  %140 = vmatpush2.bf16.xpose.msra.mxu0 0
  %141 = vmatprep.subr.bf16.mxu0 0
  %142 = vmatpush2.bf16.xpose.msra.mxu0 0
  %143 = vmatprep.subr.bf16.mxu0 0
  %144 = vmatpush2.bf16.xpose.msra.mxu0 0
  %145 = vmatprep.mubr.bf16.mxu0 0
  %146 = vmatmul.mubr.bf16.gmra.mxu0 %v87
  %v147 = vpop.f32.mrf.mxu0
  %v148 = vadd.f32 %v38, %v147
  %v149 = vpop.f32.mrf.mxu0
  %v150 = vpop.f32.mrf.mxu0
  %v151 = vadd.f32 %v38, %v150
  %v152 = vpop.f32.mrf.mxu0
  %153 = vdwg.mxu0
  %v154 = vmax.f32 %v148, 0.0
  %v155 = vmax.f32 %v151, 0.0
  %156 = vst [vmem:[%s3] sm:$0xff] %v154
  %157 = vst [vmem:[%s3 + $0x8] sm:$0xff] %v155
  // Predicated region
  $region14: #{entity_embedder.1} parent=0 // pred_check
    _
  $region15: #{entity_embedder.1} parent=0 // pred_check_branch
    %159 = sbr.rel (0) target = $region17
  $region16: #{entity_embedder.1} parent=0 // pred_region
    _
  $region17: #{entity_embedder.1} parent=0 // pred_fallthru
    _
  // Predicated region
  $region18: #{entity_embedder.1} parent=0 // pred_check
    _
  $region19: #{entity_embedder.1} parent=0 // pred_check_branch
    %161 = sbr.rel (0) target = $region21
  $region20: #{entity_embedder.1} parent=0 // pred_region
    _
  $region21: #{entity_embedder.1} parent=0 // pred_fallthru
    _

</llo_original>
